<compile_context>
chip_gen: v7x
topology: tpu7x:2x2x1
jax: 0.10.0
libtpu: 0.0.40
codegen_flags: <defaults>
</compile_context>

<pallas_src>
import jax
import jax.numpy as jnp
from jax.experimental import pallas as pl
from jax.experimental.pallas import tpu as pltpu

_LANE = 128     # vreg lane width (last-dim tiling unit)
_SUBLANE = 8    # vreg sublane width (second-to-last-dim tiling unit, f32)


def _round_up(x, m):
    return ((x + m - 1) // m) * m


def _cdiv(a, b):
    return (a + b - 1) // b


def _vmem_budget_and_limit():
    """Generation-aware scoped-VMEM budget (v5e/v6e: 128 MiB phys, v7x: 64 MiB/TC)."""
    cap = 64 << 20  # conservative default = v7x per-TensorCore capacity
    try:
        info = pltpu.get_tpu_info()
        cap = int(getattr(info, "vmem_capacity_bytes", cap)) or cap
    except Exception:
        pass
    if cap >= (96 << 20):            # v5e / v6e: 128 MiB physical VMEM
        return 64 << 20, 96 << 20
    return 40 << 20, 56 << 20        # v7x: 64 MiB per TensorCore


# ---------------------------------------------------------------------------
# Kernel bodies
# ---------------------------------------------------------------------------

def _linear_kernel_resident(x_ref, wt_ref, b_ref, o_ref):
    # x_ref:  [TB, H]      streamed per batch-grid step
    # wt_ref: [H, O_pad]   VMEM-resident (same block every step)
    # b_ref:  [1, O_pad]   VMEM-resident
    # o_ref:  [TB, O_pad]  lane-dense (unmasked) store
    acc = jnp.dot(x_ref[...], wt_ref[...], preferred_element_type=jnp.float32)
    o_ref[...] = (acc + b_ref[...]).astype(o_ref.dtype)


def _linear_kernel_tiled(x_ref, wt_ref, b_ref, o_ref, acc_ref):
    # Grid: (batch tiles, output tiles, K tiles); K (reduction) axis is last.
    k = pl.program_id(2)

    @pl.when(k == 0)
    def _():
        acc_ref[...] = jnp.zeros_like(acc_ref)

    acc_ref[...] += jnp.dot(x_ref[...], wt_ref[...],
                            preferred_element_type=jnp.float32)

    @pl.when(k == pl.num_programs(2) - 1)
    def _():
        o_ref[...] = (acc_ref[...] + b_ref[...]).astype(o_ref.dtype)


# ---------------------------------------------------------------------------
# Param preparation (one-time, at load) and forward
# ---------------------------------------------------------------------------

def prepare_output_layer_params(weight, bias, *, weight_dtype=None):
    """One-time conversion from PyTorch nn.Linear layout ([O,H], [O]) to kernel
    layout ([H,O_pad], [1,O_pad]).  Transpose, lane-padding of the head dim and
    the optional weight dtype cast all happen here, never per forward call."""
    o, _h = weight.shape
    wt = jnp.asarray(weight).T                                   # [H, O]
    if weight_dtype is not None:
        wt = wt.astype(weight_dtype)
    b2 = jnp.asarray(bias, dtype=jnp.float32).reshape(1, o)      # bias added in f32
    # Lane-dense output stores; round to 256 (v6e/v7x MXU output width) once
    # the head itself exceeds one lane group.
    o_pad = _round_up(o, _LANE if o <= _LANE else 2 * _LANE)
    if o_pad != o:
        wt = jnp.pad(wt, ((0, 0), (0, o_pad - o)))
        b2 = jnp.pad(b2, ((0, 0), (0, o_pad - o)))
    return wt, b2, o


def output_layer_forward(x, params, *, block_b=1024, block_k=None,
                         force_pallas=False, _force_tiled=False):
    """OutputLayer.forward (default nn.Linear path).

    x:      [B, H] activations (any float dtype the trunk produces)
    params: (wt [H, O_pad], b2 [1, O_pad], n_out) from prepare_output_layer_params
    returns [B, n_out] in x's dtype.
    """
    wt, b2, n_out = params
    B, H = x.shape
    O_pad = wt.shape[1]
    out_dtype = x.dtype

    # Tiny problems: pallas_call launch + per-step overhead dwarfs the work.
    if not force_pallas and B * H <= (1 << 16):
        y = (jnp.dot(x, wt, preferred_element_type=jnp.float32)
             + b2).astype(out_dtype)
        return y[:, :n_out]

    x_isz = jnp.dtype(x.dtype).itemsize
    w_isz = jnp.dtype(wt.dtype).itemsize
    b_isz = jnp.dtype(b2.dtype).itemsize
    o_isz = jnp.dtype(out_dtype).itemsize

    vmem_budget, vmem_limit = _vmem_budget_and_limit()

    # Pallas double-buffers every input, including the constant-index resident
    # W^T / bias blocks -> count them 2x.  Streamed x / out tiles also 2x.
    resident2 = 2 * (H * O_pad * w_isz + O_pad * b_isz)
    per_row = 2 * (H * x_isz + O_pad * o_isz)
    use_tiled = _force_tiled or (resident2 + _SUBLANE * per_row > vmem_budget)

    if not use_tiled:
        # --- resident-weight path (common case: modest H, small head) -------
        max_tb = (vmem_budget - resident2) // max(per_row, 1)
        tb = min(block_b, max_tb, _round_up(B, _SUBLANE))
        tb = max(_SUBLANE, (tb // _SUBLANE) * _SUBLANE)

        steps = _cdiv(B, tb)
        # Keep the batch-grid step count even so both v7x TensorCores get
        # equal work under dimension_semantics=("parallel",).
        if steps > 1 and steps % 2 == 1:
            tb = max(_SUBLANE, _round_up(_cdiv(B, steps + 1), _SUBLANE))
            steps = _cdiv(B, tb)

        cost = pl.CostEstimate(
            flops=2 * B * H * O_pad,
            transcendentals=0,
            bytes_accessed=(B * H * x_isz + H * O_pad * w_isz
                            + B * O_pad * o_isz),
        )

        out = pl.pallas_call(
            _linear_kernel_resident,
            out_shape=jax.ShapeDtypeStruct((B, O_pad), out_dtype),
            grid=(steps,),
            in_specs=[
                pl.BlockSpec((tb, H), lambda i: (i, 0)),       # x: streamed rows
                pl.BlockSpec((H, O_pad), lambda i: (0, 0)),    # W^T: resident
                pl.BlockSpec((1, O_pad), lambda i: (0, 0)),    # bias: resident
            ],
            out_specs=pl.BlockSpec((tb, O_pad), lambda i: (i, 0)),
            compiler_params=pltpu.CompilerParams(
                dimension_semantics=("parallel",),
                vmem_limit_bytes=vmem_limit,
            ),
            cost_estimate=cost,
        )(x, wt, b2)
        return out[:, :n_out]

    # --- fallback path: tile O (parallel) and K=H (reduction + accumulator) --
    to = 2 * _LANE if (O_pad > _LANE and O_pad % (2 * _LANE) == 0) else _LANE
    tk = H
    k_cap = block_k if block_k is not None else 2048
    for cand in (2048, 1024, 512, 256, 128, 64, 32, 16, 8):
        if cand <= k_cap and H % cand == 0:
            tk = cand
            break

    fixed2 = 2 * (tk * to * w_isz + to * b_isz)
    per_row_t = 2 * (tk * x_isz + to * o_isz) + to * 4   # + f32 accumulator row
    max_tb = (vmem_budget - fixed2) // max(per_row_t, 1)
    tb = min(block_b, max_tb, _round_up(B, _SUBLANE))
    tb = max(_SUBLANE, (tb // _SUBLANE) * _SUBLANE)

    nb = _cdiv(B, tb)
    if nb > 1 and nb % 2 == 1:
        tb = max(_SUBLANE, _round_up(_cdiv(B, nb + 1), _SUBLANE))
        nb = _cdiv(B, tb)
    no = O_pad // to
    nk = H // tk

    cost = pl.CostEstimate(
        flops=2 * B * H * O_pad,
        transcendentals=0,
        bytes_accessed=(no * B * H * x_isz + nb * H * O_pad * w_isz
                        + B * O_pad * o_isz),
    )

    out = pl.pallas_call(
        _linear_kernel_tiled,
        out_shape=jax.ShapeDtypeStruct((B, O_pad), out_dtype),
        grid=(nb, no, nk),
        in_specs=[
            pl.BlockSpec((tb, tk), lambda i, j, k: (i, k)),
            pl.BlockSpec((tk, to), lambda i, j, k: (k, j)),
            pl.BlockSpec((1, to), lambda i, j, k: (0, j)),
        ],
        out_specs=pl.BlockSpec((tb, to), lambda i, j, k: (i, j)),
        scratch_shapes=[pltpu.VMEM((tb, to), jnp.float32)],
        compiler_params=pltpu.CompilerParams(
            dimension_semantics=("parallel", "parallel", "arbitrary"),
            vmem_limit_bytes=vmem_limit,
        ),
        cost_estimate=cost,
    )(x, wt, b2)
    return out[:, :n_out]


def init_output_layer_params(key, last_hidden_dim, n_output_heads):
    """Deterministic params matching OutputLayer.initialize() for the default
    path: xavier_uniform_(weight), bias.fill_(0.01). PyTorch layout [O, H]."""
    fan_in, fan_out = last_hidden_dim, n_output_heads
    bound = (6.0 / (fan_in + fan_out)) ** 0.5
    weight = jax.random.uniform(
        key, (n_output_heads, last_hidden_dim),
        minval=-bound, maxval=bound, dtype=jnp.float32)
    bias = jnp.full((n_output_heads,), 0.01, dtype=jnp.float32)
    return weight, bias


if __name__ == "__main__":
    # Small shapes consistent with the module: batch=8, hidden=32, heads=4.
    batch, last_hidden_dim, n_output_heads = 8, 32, 4

    key = jax.random.PRNGKey(0)
    k_x, k_w, k_x2, k_w2 = jax.random.split(key, 4)

    x = jax.random.normal(k_x, (batch, last_hidden_dim), dtype=jnp.float32)
    weight, bias = init_output_layer_params(k_w, last_hidden_dim, n_output_heads)

    # One-time layout conversion + lane padding (paid at param load).
    params = prepare_output_layer_params(weight, bias)

    # Force the Pallas resident-weight path even at this toy size.
    logits = jax.block_until_ready(
        output_layer_forward(x, params, force_pallas=True))
    ref = x @ weight.T + bias
    assert logits.shape == (batch, n_output_heads)
    assert jnp.allclose(logits, ref, atol=1e-5, rtol=1e-5)

    # Auto-dispatch (plain-JAX tiny-shape) path keeps identical semantics.
    logits_auto = jax.block_until_ready(output_layer_forward(x, params))
    assert jnp.allclose(logits_auto, ref, atol=1e-5, rtol=1e-5)

    # Exercise the tiled / accumulator fallback (used when the resident W^T
    # would not fit scoped VMEM) on a still-small shape with 2 K-steps.
    batch2, hidden2, heads2 = 64, 256, 4
    x2 = jax.random.normal(k_x2, (batch2, hidden2), dtype=jnp.float32)
    weight2, bias2 = init_output_layer_params(k_w2, hidden2, heads2)
    params2 = prepare_output_layer_params(weight2, bias2)
    logits2 = jax.block_until_ready(
        output_layer_forward(x2, params2, force_pallas=True,
                             _force_tiled=True, block_k=128))
    ref2 = x2 @ weight2.T + bias2
    assert logits2.shape == (batch2, heads2)
    assert jnp.allclose(logits2, ref2, atol=1e-4, rtol=1e-4)

    # TODO(synk): BBP / evidential (NIG) uncertainty branches are separate
    # sampling submodules; only the default nn.Linear path is implemented.
    print("KERNEL_OK")
</pallas_src>

<mosaic_0001>
module attributes {stable_mosaic.version = 11 : i64} {
  func.func @_linear_kernel_resident(%arg0: i32, %arg1: memref<8x32xf32, #tpu.memory_space<vmem>>, %arg2: memref<32x128xf32, #tpu.memory_space<vmem>>, %arg3: memref<1x128xf32, #tpu.memory_space<vmem>>, %arg4: memref<8x128xf32, #tpu.memory_space<vmem>>) attributes {dimension_semantics = [#tpu.dimension_semantics<parallel>], iteration_bounds = array<i64: 1>, scalar_prefetch = 0 : i64, scratch_operands = 0 : i64, tpu.core_type = #tpu.core_type<tc>, window_params = [{transform_indices = @transform_0, window_bounds = array<i64: 8, 32>}, {pipeline_mode = #tpu.pipeline_mode<synchronous>, transform_indices = @transform_1, window_bounds = array<i64: 32, 128>}, {pipeline_mode = #tpu.pipeline_mode<synchronous>, transform_indices = @transform_2, window_bounds = array<i64: 1, 128>}, {transform_indices = @transform_3, window_bounds = array<i64: 8, 128>}]} {
    %c0 = arith.constant 0 : index
    %c0_0 = arith.constant 0 : index
    %0 = vector.load %arg1[%c0, %c0_0] : memref<8x32xf32, #tpu.memory_space<vmem>>, vector<8x32xf32>
    %c0_1 = arith.constant 0 : index
    %c0_2 = arith.constant 0 : index
    %1 = vector.load %arg2[%c0_1, %c0_2] : memref<32x128xf32, #tpu.memory_space<vmem>>, vector<32x128xf32>
    %cst = arith.constant dense<0.000000e+00> : vector<8x128xf32>
    %2 = tpu.matmul %0, %1, %cst {dimension_numbers = #tpu.dot_dimension_numbers<[1], [0], [0], [1], [0, 0, 1, 1], [], []>} : vector<8x32xf32>, vector<32x128xf32>, vector<8x128xf32> -> vector<8x128xf32>
    %c0_3 = arith.constant 0 : index
    %c0_4 = arith.constant 0 : index
    %3 = vector.load %arg3[%c0_3, %c0_4] : memref<1x128xf32, #tpu.memory_space<vmem>>, vector<1x128xf32>
    %4 = vector.broadcast %3 : vector<1x128xf32> to vector<8x128xf32>
    %5 = arith.addf %2, %4 : vector<8x128xf32>
    %c0_5 = arith.constant 0 : index
    %c0_6 = arith.constant 0 : index
    %6 = vector.load %arg4[%c0_5, %c0_6] : memref<8x128xf32, #tpu.memory_space<vmem>>, vector<8x128xf32>
    tpu.vector_store %arg4[%c0_5, %c0_6], %5 {strides = array<i32>} : memref<8x128xf32, #tpu.memory_space<vmem>>, vector<8x128xf32>,
    return
  }
  func.func @transform_0(%arg0: i32) -> (i32, i32) {
    %c0_i32 = arith.constant 0 : i32
    %c0_i32_0 = arith.constant 0 : i32
    return %arg0, %c0_i32 : i32, i32
  }
  func.func @transform_1(%arg0: i32) -> (i32, i32) {
    %c0_i32 = arith.constant 0 : i32
    %c0_i32_0 = arith.constant 0 : i32
    %c0_i32_1 = arith.constant 0 : i32
    return %c0_i32, %c0_i32_0 : i32, i32
  }
  func.func @transform_2(%arg0: i32) -> (i32, i32) {
    %c0_i32 = arith.constant 0 : i32
    %c0_i32_0 = arith.constant 0 : i32
    %c0_i32_1 = arith.constant 0 : i32
    return %c0_i32, %c0_i32_0 : i32, i32
  }
  func.func @transform_3(%arg0: i32) -> (i32, i32) {
    %c0_i32 = arith.constant 0 : i32
    %c0_i32_0 = arith.constant 0 : i32
    return %arg0, %c0_i32 : i32, i32
  }
}

</mosaic_0001>

<llo_original>
// kernel: tpu_custom_call.1
$region0: #{tpu_custom_call.1}
  #allocation0 [shape = 'u32[]', space=smem, size = 0x4, offset = 0x4, fixed_abs, tag = 'smem constant byte address 0x4 - core index']
  #allocation1 [shape = 'u32[144,128]{1,0:T(1,128)}', space=vmem, size = 0x12000, scoped, tag = 'internal scratch']
  %s0 = inlined_call_operand.hbm [shape: f32[8,32], index: 0, kind: input, shape index: {}]
  %s1 = inlined_call_operand.hbm [shape: f32[32,128], index: 1, kind: input, shape index: {}]
  %s2 = inlined_call_operand.vmem [shape: f32[1,128], index: 2, kind: input, shape index: {}]
  %s3 = inlined_call_operand.hbm [shape: f32[8,128], index: 3, kind: output, shape index: {}]
  %s4 = sld [smem:[#allocation0]]
  $region30: #{tpu_custom_call.1} parent=0
    _
  %s6 = ssub.s32 1, %s4
  %s7 = scalar_select 0, %s6, %s4
  $region1: #{tpu_custom_call.1} parent=0
    #allocation2 [shape = 'u8[4096]{0}', space=vmem, size = 0x1000, scoped, tag = 'input window, operand 0, single buffered']
    #allocation3 [shape = 's32[1]{0}', space=sflag, size = 0x4, scoped, tag = 'scoped memory for tpu_custom_call.1']
    #allocation4 [shape = 's32[1]{0}', space=sflag, size = 0x4, scoped, tag = 'scoped memory for tpu_custom_call.1']
    #allocation5 [shape = 'u8[16384]{0}', space=vmem, size = 0x4000, scoped, tag = 'input window, operand 1, single buffered']
    #allocation6 [shape = 's32[1]{0}', space=sflag, size = 0x4, scoped, tag = 'scoped memory for tpu_custom_call.1']
    #allocation7 [shape = 'u8[4096]{0}', space=vmem, size = 0x1000, scoped, tag = 'output window, operand 0, single buffered']
    %8 = vsyncpa [#allocation3], 0
    %9 = vsyncpa [#allocation6], 0
    %10 = vsyncpa [#allocation4], 0
    // Predicated region
    $region2: #{tpu_custom_call.1} parent=1 // pred_check
      _
    $region3: #{tpu_custom_call.1} parent=1 // pred_check_branch
      %12 = sbr.rel (0) target = $region5
    $region4: #{tpu_custom_call.1} parent=1 // pred_region
      %s14 = ssub.s32 128, 128
      %15 = vsyncadd [#allocation3], %s14
      %s17 = sshll.u32 [#allocation2], 4
      %s18 = int_to_ptr.vmem [resolvable:$true] %s17
      %20 = dma.hbm_to_vmem [thread:$0]  %s0, 128, %s18, [#allocation3]
    $region5: #{tpu_custom_call.1} parent=1 // pred_fallthru
      _
    // Predicated region
    $region6: #{tpu_custom_call.1} parent=1 // pred_check
      _
    $region7: #{tpu_custom_call.1} parent=1 // pred_check_branch
      %22 = sbr.rel (0) target = $region9
    $region8: #{tpu_custom_call.1} parent=1 // pred_region
      %s24 = ssub.s32 512, 512
      %25 = vsyncadd [#allocation6], %s24
      %s26 = sshll.u32 [#allocation5], 4
      %s27 = int_to_ptr.vmem [resolvable:$true] %s26
      %32 = dma.hbm_to_vmem [thread:$0]  %s1, 512, %s27, [#allocation6], 128, 128, 8
    $region9: #{tpu_custom_call.1} parent=1 // pred_fallthru
      _
    // Predicated region
    $region10: #{tpu_custom_call.1} parent=1 // pred_check
      _
    $region11: #{tpu_custom_call.1} parent=1 // pred_check_branch
      %34 = sbr.rel (0) target = $region13
    $region12: #{tpu_custom_call.1} parent=1 // pred_region
      _
    $region13: #{tpu_custom_call.1} parent=1 // pred_fallthru
      _
    // Predicated region
    $region14: #{tpu_custom_call.1} parent=1 // pred_check
      _
    $region15: #{tpu_custom_call.1} parent=1 // pred_check_branch
      %36 = sbr.rel (0) target = $region17
    $region16: #{tpu_custom_call.1} parent=1 // pred_region
      %37 = dma.done [#allocation3], 128
    $region17: #{tpu_custom_call.1} parent=1 // pred_fallthru
      _
    // Predicated region
    $region18: #{tpu_custom_call.1} parent=1 // pred_check
      _
    $region19: #{tpu_custom_call.1} parent=1 // pred_check_branch
      %39 = sbr.rel (0) target = $region21
    $region20: #{tpu_custom_call.1} parent=1 // pred_region
      %40 = dma.done [#allocation6], 512
    $region21: #{tpu_custom_call.1} parent=1 // pred_fallthru
      _
    %v41 = vld [vmem:[#allocation2] sm:$0xff]
    %v42 = vld [vmem:[#allocation5] sm:$0xff]
    %v43 = vld [vmem:[#allocation5 + $0x8] sm:$0xff]
    %v44 = vld [vmem:[#allocation5 + $0x10] sm:$0xff]
    %v45 = vld [vmem:[#allocation5 + $0x18] sm:$0xff]
    %v46 = vld [vmem:[%s2] sm:$0x1]
    %v48 = vlaneseq
    %v49 = vshrl.u32 %v48, 7
    %v50 = vsub.s32 0, %v49
    %v51 = vrot.slane %v46, %v50
    %vm53 = vcmask 261120
    %v55 = vsel %vm53, %v41, 0
    %57 = vmatprep.subr.mxu0 0.0
    %58 = vmatpush1.msra.mxu0 %v42
    %59 = vmatprep.subr.mxu0 0.0
    %60 = vmatpush1.msra.mxu0 %v43
    %61 = vmatprep.subr.mxu0 0.0
    %62 = vmatpush1.msra.mxu0 %v44
    %63 = vmatprep.subr.mxu0 0.0
    %64 = vmatpush1.msra.mxu0 %v45
    %65 = vmatprep.subr.mxu0 0.0
    %66 = vmatpush1.msra.mxu0 0.0
    %67 = vmatprep.subr.mxu0 0.0
    %68 = vmatpush1.msra.mxu0 0.0
    %69 = vmatprep.subr.mxu0 0.0
    %70 = vmatpush1.msra.mxu0 0.0
    %71 = vmatprep.subr.mxu0 0.0
    %72 = vmatpush1.msra.mxu0 0.0
    %73 = vmatprep.subr.mxu0 0.0
    %74 = vmatpush1.msra.mxu0 0.0
    %75 = vmatprep.subr.mxu0 0.0
    %76 = vmatpush1.msra.mxu0 0.0
    %77 = vmatprep.subr.mxu0 0.0
    %78 = vmatpush1.msra.mxu0 0.0
    %79 = vmatprep.subr.mxu0 0.0
    %80 = vmatpush1.msra.mxu0 0.0
    %81 = vmatprep.subr.mxu0 0.0
    %82 = vmatpush1.msra.mxu0 0.0
    %83 = vmatprep.subr.mxu0 0.0
    %84 = vmatpush1.msra.mxu0 0.0
    %85 = vmatprep.subr.mxu0 0.0
    %86 = vmatpush1.msra.mxu0 0.0
    %87 = vmatprep.subr.mxu0 0.0
    %88 = vmatpush1.msra.mxu0 0.0
    %89 = vmatprep.subr.mxu0 0.0
    %90 = vmatpush1.msra.mxu0 0.0
    %91 = vmatprep.subr.mxu0 0.0
    %92 = vmatpush1.msra.mxu0 0.0
    %93 = vmatprep.subr.mxu0 0.0
    %94 = vmatpush1.msra.mxu0 0.0
    %95 = vmatprep.subr.mxu0 0.0
    %96 = vmatpush1.msra.mxu0 0.0
    %97 = vmatprep.subr.mxu0 0.0
    %98 = vmatpush1.msra.mxu0 0.0
    %99 = vmatprep.subr.mxu0 0.0
    %100 = vmatpush1.msra.mxu0 0.0
    %101 = vmatprep.subr.mxu0 0.0
    %102 = vmatpush1.msra.mxu0 0.0
    %103 = vmatprep.subr.mxu0 0.0
    %104 = vmatpush1.msra.mxu0 0.0
    %105 = vmatprep.subr.mxu0 0.0
    %106 = vmatpush1.msra.mxu0 0.0
    %107 = vmatprep.subr.mxu0 0.0
    %108 = vmatpush1.msra.mxu0 0.0
    %109 = vmatprep.subr.mxu0 0.0
    %110 = vmatpush1.msra.mxu0 0.0
    %111 = vmatprep.subr.mxu0 0.0
    %112 = vmatpush1.msra.mxu0 0.0
    %113 = vmatprep.subr.mxu0 0.0
    %114 = vmatpush1.msra.mxu0 0.0
    %115 = vmatprep.subr.mxu0 0.0
    %116 = vmatpush1.msra.mxu0 0.0
    %117 = vmatprep.subr.mxu0 0.0
    %118 = vmatpush1.msra.mxu0 0.0
    %119 = vmatprep.subr.mxu0 0.0
    %120 = vmatpush1.msra.mxu0 0.0
    %121 = vmatprep.mubr.f32.mxu0 0.0
    %122 = vmatmul.mubr.f32.gmra.mrb[0].mxu0 %v55
    %v123 = vpop.f32.mrb[0].mxu0
    %v124 = vadd.f32 %v51, %v123
    %v125 = vpop.f32.mrb[0].mxu0
    %126 = vdwg.mxu0
    %127 = vst [vmem:[#allocation7] sm:$0xff] %v124
    // Predicated region
    $region22: #{tpu_custom_call.1} parent=1 // pred_check
      _
    $region23: #{tpu_custom_call.1} parent=1 // pred_check_branch
      %129 = sbr.rel (0) target = $region25
    $region24: #{tpu_custom_call.1} parent=1 // pred_region
      %s131 = ssub.s32 128, 128
      %132 = vsyncadd [#allocation4], %s131
      %s134 = sshll.u32 [#allocation7], 4
      %s135 = int_to_ptr.vmem [resolvable:$true] %s134
      %137 = dma.vmem_to_hbm [thread:$0]  %s135, 128, %s3, [#allocation4]
    $region25: #{tpu_custom_call.1} parent=1 // pred_fallthru
      _
    // Predicated region
    $region26: #{tpu_custom_call.1} parent=1 // pred_check
      _
    $region27: #{tpu_custom_call.1} parent=1 // pred_check_branch
      %139 = sbr.rel (0) target = $region29
    $region28: #{tpu_custom_call.1} parent=1 // pred_region
      %140 = dma.done [#allocation4], 128
    $region29: #{tpu_custom_call.1} parent=1 // pred_fallthru
      _
    %141 = vsyncpa [#allocation3], 1
    %142 = vsyncpa [#allocation6], 1
    %143 = vsyncpa [#allocation4], 1

</llo_original>
